<compile_context>
chip_gen: v6e
topology: v6e:2x2x1
jax: 0.10.0
libtpu: 0.0.40
codegen_flags: <defaults>
</compile_context>

<pallas_src>
import functools

import numpy as np
import jax
import jax.numpy as jnp
from jax.experimental import pallas as pl
from jax.experimental.pallas import tpu as pltpu


def _bilinear_matrix(in_size: int, scale: int = 2) -> np.ndarray:
    """Interp matrix A, shape (in_size*scale, in_size): out_rows = A @ x.

    Matches torch nn.Upsample(scale_factor=scale, mode='bilinear',
    align_corners=False): src = (dst + 0.5)/scale - 0.5 clamped at 0, source
    indices clamped to [0, in_size-1]."""
    out_size = in_size * scale
    A = np.zeros((out_size, in_size), dtype=np.float32)
    for i in range(out_size):
        src = max((i + 0.5) / scale - 0.5, 0.0)
        i0 = int(np.floor(src))
        i1 = min(i0 + 1, in_size - 1)
        w1 = src - i0
        A[i, i0] += 1.0 - w1
        A[i, i1] += w1
    return A


_MOSAIC_HEADROOM = 2 << 20        # slack for Mosaic-internal scratch


def _vmem_limit_bytes() -> int:
    """Per-generation scoped-VMEM request: v5e/v6e (128 MiB physical) -> 48
    MiB, v7x (64 MiB per TensorCore) -> 24 MiB."""
    phys = 64 << 20               # conservative default (v7x per-TC VMEM)
    try:
        info = pltpu.get_tpu_info()
        phys = int(getattr(info, "vmem_capacity_bytes", phys) or phys)
    except Exception:
        pass
    return int(min((phys * 3) // 8, 48 << 20))


def _pick_tb(nc: int, per_row_bytes: int, budget_bytes: int,
             min_steps: int = 8) -> int:
    """Channel-batch size: multiple of 8 (or the full N*C), fits the VMEM
    budget, and small enough that the grid has >= min_steps steps whenever
    nc allows it (>= 4 steps per TensorCore on v7x, and software pipelining
    on every generation; per-step overhead is only ~0.35 us)."""
    if nc <= 8:
        return nc                                    # full-dim block is legal
    cap = max(8, (budget_bytes // max(per_row_bytes, 1)) // 8 * 8)
    tb_steps = max(8, ((-(-nc // min_steps)) + 7) // 8 * 8)
    return max(8, min(cap, tb_steps, (nc // 8) * 8))


def _seb3_kron_kernel(x1_ref, x2_ref, k_ref, out_ref, *, precision):
    # x1_ref/out_ref: (TB, Ho*Wo)   x2_ref: (TB, Hi*Wi)   k_ref: (Hi*Wi, Ho*Wo)
    up = jnp.dot(x2_ref[...], k_ref[...],
                 preferred_element_type=jnp.float32, precision=precision)
    out_ref[...] = (x1_ref[...].astype(jnp.float32) * up).astype(out_ref.dtype)


def _seb3_separable_kernel(x1_ref, x2_ref, ah_ref, aw_ref, out_ref, *,
                           precision):
    # x1_ref/out_ref: (TB, Ho, Wo)   x2_ref: (TB, Hi, Wi)
    # ah_ref: (Ho, Hi)               aw_ref: (Wi, Wo)
    up_w = jnp.einsum("bhw,wq->bhq", x2_ref[...], aw_ref[...],
                      preferred_element_type=jnp.float32, precision=precision)
    up = jnp.einsum("bhq,ph->bpq", up_w, ah_ref[...],
                    preferred_element_type=jnp.float32, precision=precision)
    out_ref[...] = (x1_ref[...].astype(jnp.float32) * up).astype(out_ref.dtype)


def seb3_forward(x1, x2):
    """x1: (N, C, 2H, 2W), x2: (N, C, H, W)  ->  x1 * bilinear_up_2x(x2)."""
    N, C, Ho, Wo = x1.shape
    N2, C2, Hi, Wi = x2.shape
    assert (N, C) == (N2, C2) and Ho == 2 * Hi and Wo == 2 * Wi

    nc = N * C
    out_dtype = jnp.result_type(x1.dtype, x2.dtype)
    ah_np = _bilinear_matrix(Hi)          # (Ho, Hi)
    aw_np = _bilinear_matrix(Wi).T        # (Wi, Wo)

    if x2.dtype == jnp.bfloat16:
        wdtype = jnp.bfloat16             # 0.25-multiples are exact in bf16
        precision = None                  # native bf16 MXU matmul
    else:
        wdtype = jnp.float32
        precision = jax.lax.Precision.HIGHEST   # f32 parity with PyTorch

    itx1, itx2 = x1.dtype.itemsize, x2.dtype.itemsize
    ito = jnp.dtype(out_dtype).itemsize
    witem = jnp.dtype(wdtype).itemsize

    vmem_limit = _vmem_limit_bytes()
    compiler_params = pltpu.CompilerParams(
        dimension_semantics=("parallel",), vmem_limit_bytes=vmem_limit)

    kron_bytes = (Hi * Wi) * (Ho * Wo) * witem
    # Keep the Kron matmul memory-bound on every generation (incl. v5e).
    kron_limit = (2 << 20) if wdtype == jnp.bfloat16 else (1 << 20)
    use_kron = kron_bytes <= kron_limit

    def _run(fast_api: bool):
        prec = precision if fast_api else None

        def resident_spec(shape):
            # Grid-invariant operand: a single resident VMEM copy (no double
            # buffering).  Compatibility fallback: constant-index BlockSpec.
            if fast_api:
                return pl.BlockSpec(memory_space=pltpu.MemorySpace.VMEM)
            return pl.BlockSpec(shape, lambda i: tuple(0 for _ in shape))

        if use_kron:
            # ---- fused lane-dense Kronecker-matmul path --------------------
            kmat = jnp.asarray(np.kron(ah_np.T, aw_np), dtype=wdtype)
            x1f = x1.reshape(nc, Ho * Wo)             # wrapper-side reshapes
            x2f = x2.reshape(nc, Hi * Wi)

            # Honest per-row accounting: double-buffered pipelined tiles plus
            # the f32 matmul-result / cast temporaries.
            per_row = (2 * (Ho * Wo * itx1 + Hi * Wi * itx2 + Ho * Wo * ito)
                       + 4 * (2 * Ho * Wo + Hi * Wi))
            budget = int(0.9 * (vmem_limit - kron_bytes - _MOSAIC_HEADROOM))
            tb = _pick_tb(nc, per_row, budget)
            grid = (pl.cdiv(nc, tb),)

            cost = pl.CostEstimate(
                flops=2 * nc * Hi * Wi * Ho * Wo + nc * Ho * Wo,
                transcendentals=0,
                bytes_accessed=(x1f.size * itx1 + x2f.size * itx2
                                + nc * Ho * Wo * ito + kron_bytes))

            out = pl.pallas_call(
                functools.partial(_seb3_kron_kernel, precision=prec),
                out_shape=jax.ShapeDtypeStruct((nc, Ho * Wo), out_dtype),
                grid_spec=pltpu.PrefetchScalarGridSpec(
                    num_scalar_prefetch=0,
                    grid=grid,
                    in_specs=[
                        pl.BlockSpec((tb, Ho * Wo), lambda i: (i, 0)),   # x1
                        pl.BlockSpec((tb, Hi * Wi), lambda i: (i, 0)),   # x2
                        resident_spec((Hi * Wi, Ho * Wo)),               # K
                    ],
                    out_specs=pl.BlockSpec((tb, Ho * Wo), lambda i: (i, 0)),
                ),
                compiler_params=compiler_params,
                cost_estimate=cost,
            )(x1f, x2f, kmat)
            return out.reshape(N, C, Ho, Wo)

        # ---- large-spatial fallback: batched separable upsample ------------
        # TODO(synk): for Wo < 128 this path still emits masked (sub-128-lane)
        # stores; a pltpu.roll-based 4-tap stencil with a flat (TB, Ho*Wo)
        # output would be fully lane-dense, but this module's shapes hit the
        # Kron path above.
        x1f = x1.reshape(nc, Ho, Wo)
        x2f = x2.reshape(nc, Hi, Wi)
        ah = jnp.asarray(ah_np, dtype=wdtype)
        aw = jnp.asarray(aw_np, dtype=wdtype)
        static = (ah.size + aw.size) * witem

        per_row = (2 * (Ho * Wo * itx1 + Hi * Wi * itx2 + Ho * Wo * ito)
                   + 4 * (Hi * Wo + 2 * Ho * Wo + Hi * Wi))   # f32 temps
        budget = int(0.9 * (vmem_limit - static - _MOSAIC_HEADROOM))
        tb = _pick_tb(nc, per_row, budget)
        grid = (pl.cdiv(nc, tb),)

        cost = pl.CostEstimate(
            flops=2 * nc * Hi * Wi * Wo + 2 * nc * Hi * Ho * Wo + nc * Ho * Wo,
            transcendentals=0,
            bytes_accessed=(x1f.size * itx1 + x2f.size * itx2
                            + nc * Ho * Wo * ito + static))

        out = pl.pallas_call(
            functools.partial(_seb3_separable_kernel, precision=prec),
            out_shape=jax.ShapeDtypeStruct((nc, Ho, Wo), out_dtype),
            grid_spec=pltpu.PrefetchScalarGridSpec(
                num_scalar_prefetch=0,
                grid=grid,
                in_specs=[
                    pl.BlockSpec((tb, Ho, Wo), lambda i: (i, 0, 0)),     # x1
                    pl.BlockSpec((tb, Hi, Wi), lambda i: (i, 0, 0)),     # x2
                    resident_spec((Ho, Hi)),                             # A_h
                    resident_spec((Wi, Wo)),                             # A_w
                ],
                out_specs=pl.BlockSpec((tb, Ho, Wo), lambda i: (i, 0, 0)),
            ),
            compiler_params=compiler_params,
            cost_estimate=cost,
        )(x1f, x2f, ah, aw)
        return out.reshape(N, C, Ho, Wo)

    try:
        return _run(fast_api=True)
    except Exception:
        # Compatibility fallback for jax builds without whole-array VMEM
        # in_specs or dot `precision` support in Mosaic; same math, with
        # default-pipelined weight matrices and default matmul precision.
        return _run(fast_api=False)


if __name__ == "__main__":
    key = jax.random.PRNGKey(0)
    k1, k2, kw = jax.random.split(key, 3)

    # Small shapes: N=2, C=4, x2 spatial 8x8 -> upsampled 16x16 (== x1).
    in_channels = out_channels = 4
    x2 = jax.random.normal(k2, (2, in_channels, 8, 8), dtype=jnp.float32)
    x1 = jax.random.normal(k1, (2, in_channels, 16, 16), dtype=jnp.float32)

    # Parameters of the (unused-in-forward) conv1/BasicConv2d, mirroring
    # SEB3.__init__ shapes for fidelity; forward never touches them.
    conv1_weight = jax.random.normal(kw, (out_channels, in_channels, 3, 3),
                                     dtype=jnp.float32) * 0.05
    bn_gamma = jnp.ones((out_channels,), jnp.float32)
    bn_beta = jnp.zeros((out_channels,), jnp.float32)

    out = seb3_forward(x1, x2)
    jax.block_until_ready(out)

    # Reference: exact float64 bilinear-2x upsample built from the same
    # interpolation matrices.  Tolerance is loose enough to be independent of
    # the MXU precision mode the matmul actually ran with, while still
    # catching any structural/indexing error.
    ah64 = _bilinear_matrix(8).astype(np.float64)          # (16, 8)
    aw64 = _bilinear_matrix(8).astype(np.float64).T        # (8, 16)
    ref = (np.asarray(x1, dtype=np.float64)
           * np.einsum("ph,nchw,wq->ncpq", ah64,
                       np.asarray(x2, dtype=np.float64), aw64))
    np.testing.assert_allclose(np.asarray(out, dtype=np.float64), ref,
                               rtol=1e-2, atol=1e-2)
    print("KERNEL_OK")
</pallas_src>

<mosaic_0001>
module attributes {stable_mosaic.version = 11 : i64} {
  func.func @_seb3_kron_kernel(%arg0: i32, %arg1: memref<8x256xf32, #tpu.memory_space<vmem>>, %arg2: memref<8x64xf32, #tpu.memory_space<vmem>>, %arg3: memref<64x256xf32, #tpu.memory_space<vmem>>, %arg4: memref<8x256xf32, #tpu.memory_space<vmem>>) attributes {dimension_semantics = [#tpu.dimension_semantics<parallel>], iteration_bounds = array<i64: 1>, scalar_prefetch = 0 : i64, scratch_operands = 0 : i64, tpu.core_type = #tpu.core_type<tc>, window_params = [{transform_indices = @transform_0, window_bounds = array<i64: 8, 256>}, {transform_indices = @transform_1, window_bounds = array<i64: 8, 64>}, {pipeline_mode = #tpu.pipeline_mode<synchronous>, transform_indices = @transform_2, window_bounds = array<i64: 64, 256>}, {transform_indices = @transform_3, window_bounds = array<i64: 8, 256>}]} {
    %c0 = arith.constant 0 : index
    %c0_0 = arith.constant 0 : index
    %0 = vector.load %arg2[%c0, %c0_0] : memref<8x64xf32, #tpu.memory_space<vmem>>, vector<8x64xf32>
    %c0_1 = arith.constant 0 : index
    %c0_2 = arith.constant 0 : index
    %1 = vector.load %arg3[%c0_1, %c0_2] : memref<64x256xf32, #tpu.memory_space<vmem>>, vector<64x256xf32>
    %cst = arith.constant dense<0.000000e+00> : vector<8x256xf32>
    %2 = tpu.matmul %0, %1, %cst {dimension_numbers = #tpu.dot_dimension_numbers<[1], [0], [0], [1], [0, 0, 1, 1], [], []>, precision = #tpu.contract_precision<fp32>} : vector<8x64xf32>, vector<64x256xf32>, vector<8x256xf32> -> vector<8x256xf32>
    %c0_3 = arith.constant 0 : index
    %c0_4 = arith.constant 0 : index
    %3 = vector.load %arg1[%c0_3, %c0_4] : memref<8x256xf32, #tpu.memory_space<vmem>>, vector<8x256xf32>
    %4 = arith.mulf %3, %2 : vector<8x256xf32>
    %c0_5 = arith.constant 0 : index
    %c0_6 = arith.constant 0 : index
    %5 = vector.load %arg4[%c0_5, %c0_6] : memref<8x256xf32, #tpu.memory_space<vmem>>, vector<8x256xf32>
    tpu.vector_store %arg4[%c0_5, %c0_6], %4 {strides = array<i32>} : memref<8x256xf32, #tpu.memory_space<vmem>>, vector<8x256xf32>,
    return
  }
  func.func @transform_0(%arg0: i32) -> (i32, i32) {
    %c0_i32 = arith.constant 0 : i32
    %c0_i32_0 = arith.constant 0 : i32
    return %arg0, %c0_i32 : i32, i32
  }
  func.func @transform_1(%arg0: i32) -> (i32, i32) {
    %c0_i32 = arith.constant 0 : i32
    %c0_i32_0 = arith.constant 0 : i32
    return %arg0, %c0_i32 : i32, i32
  }
  func.func @transform_2(%arg0: i32) -> (i32, i32) {
    %c0_i32 = arith.constant 0 : i32
    %c0_i32_0 = arith.constant 0 : i32
    %c0_i32_1 = arith.constant 0 : i32
    return %c0_i32, %c0_i32_0 : i32, i32
  }
  func.func @transform_3(%arg0: i32) -> (i32, i32) {
    %c0_i32 = arith.constant 0 : i32
    %c0_i32_0 = arith.constant 0 : i32
    return %arg0, %c0_i32 : i32, i32
  }
}

module attributes {stable_mosaic.version = 11 : i64} {
  func.func @_seb3_kron_kernel(%arg0: i32, %arg1: memref<8x256xf32, #tpu.memory_space<vmem>>, %arg2: memref<8x64xf32, #tpu.memory_space<vmem>>, %arg3: memref<64x256xf32, #tpu.memory_space<vmem>>, %arg4: memref<8x256xf32, #tpu.memory_space<vmem>>) attributes {dimension_semantics = [#tpu.dimension_semantics<parallel>], iteration_bounds = array<i64: 1>, scalar_prefetch = 0 : i64, scratch_operands = 0 : i64, tpu.core_type = #tpu.core_type<tc>, window_params = [{transform_indices = @transform_0, window_bounds = array<i64: 8, 256>}, {transform_indices = @transform_1, window_bounds = array<i64: 8, 64>}, {pipeline_mode = #tpu.pipeline_mode<synchronous>, transform_indices = @transform_2, window_bounds = array<i64: 64, 256>}, {transform_indices = @transform_3, window_bounds = array<i64: 8, 256>}]} {
    %c0 = arith.constant 0 : index
    %c0_0 = arith.constant 0 : index
    %0 = vector.load %arg2[%c0, %c0_0] : memref<8x64xf32, #tpu.memory_space<vmem>>, vector<8x64xf32>
    %c0_1 = arith.constant 0 : index
    %c0_2 = arith.constant 0 : index
    %1 = vector.load %arg3[%c0_1, %c0_2] : memref<64x256xf32, #tpu.memory_space<vmem>>, vector<64x256xf32>
    %cst = arith.constant dense<0.000000e+00> : vector<8x256xf32>
    %2 = tpu.matmul %0, %1, %cst {dimension_numbers = #tpu.dot_dimension_numbers<[1], [0], [0], [1], [0, 0, 1, 1], [], []>} : vector<8x64xf32>, vector<64x256xf32>, vector<8x256xf32> -> vector<8x256xf32>
    %c0_3 = arith.constant 0 : index
    %c0_4 = arith.constant 0 : index
    %3 = vector.load %arg1[%c0_3, %c0_4] : memref<8x256xf32, #tpu.memory_space<vmem>>, vector<8x256xf32>
    %4 = arith.mulf %3, %2 : vector<8x256xf32>
    %c0_5 = arith.constant 0 : index
    %c0_6 = arith.constant 0 : index
    %5 = vector.load %arg4[%c0_5, %c0_6] : memref<8x256xf32, #tpu.memory_space<vmem>>, vector<8x256xf32>
    tpu.vector_store %arg4[%c0_5, %c0_6], %4 {strides = array<i32>} : memref<8x256xf32, #tpu.memory_space<vmem>>, vector<8x256xf32>,
    return
  }
  func.func @transform_0(%arg0: i32) -> (i32, i32) {
    %c0_i32 = arith.constant 0 : i32
    %c0_i32_0 = arith.constant 0 : i32
    return %arg0, %c0_i32 : i32, i32
  }
  func.func @transform_1(%arg0: i32) -> (i32, i32) {
    %c0_i32 = arith.constant 0 : i32
    %c0_i32_0 = arith.constant 0 : i32
    return %arg0, %c0_i32 : i32, i32
  }
  func.func @transform_2(%arg0: i32) -> (i32, i32) {
    %c0_i32 = arith.constant 0 : i32
    %c0_i32_0 = arith.constant 0 : i32
    %c0_i32_1 = arith.constant 0 : i32
    return %c0_i32, %c0_i32_0 : i32, i32
  }
  func.func @transform_3(%arg0: i32) -> (i32, i32) {
    %c0_i32 = arith.constant 0 : i32
    %c0_i32_0 = arith.constant 0 : i32
    return %arg0, %c0_i32 : i32, i32
  }
}

</mosaic_0001>

<llo_original>
// kernel: tpu_custom_call.1
$region0: #{tpu_custom_call.1}
  #allocation0 [shape = 'u32[]', space=smem, size = 0x4, offset = 0x4, fixed_abs, tag = 'smem constant byte address 0x4 - core index']
  #allocation1 [shape = 'u32[144,128]{1,0:T(1,128)}', space=vmem, size = 0x12000, scoped, tag = 'internal scratch']
  %s0 = inlined_call_operand.hbm [shape: f32[8,256], index: 0, kind: input, shape index: {}]
  %s1 = inlined_call_operand.hbm [shape: f32[8,64], index: 1, kind: input, shape index: {}]
  %s2 = inlined_call_operand.hbm [shape: f32[64,256], index: 2, kind: input, shape index: {}]
  %s3 = inlined_call_operand.hbm [shape: f32[8,256], index: 3, kind: output, shape index: {}]
  %s4 = sld [smem:[#allocation0]]
  $region34: #{tpu_custom_call.1} parent=0
    _
  %s6 = ssub.s32 1, %s4
  %s7 = scalar_select 0, %s6, %s4
  $region1: #{tpu_custom_call.1} parent=0
    #allocation2 [shape = 'u8[8192]{0}', space=vmem, size = 0x2000, scoped, tag = 'input window, operand 0, single buffered']
    #allocation3 [shape = 's32[1]{0}', space=sflag, size = 0x4, scoped, tag = 'scoped memory for tpu_custom_call.1']
    #allocation4 [shape = 's32[1]{0}', space=sflag, size = 0x4, scoped, tag = 'scoped memory for tpu_custom_call.1']
    #allocation5 [shape = 'u8[4096]{0}', space=vmem, size = 0x1000, scoped, tag = 'input window, operand 1, single buffered']
    #allocation6 [shape = 's32[1]{0}', space=sflag, size = 0x4, scoped, tag = 'scoped memory for tpu_custom_call.1']
    #allocation7 [shape = 'u8[65536]{0}', space=vmem, size = 0x10000, scoped, tag = 'input window, operand 2, single buffered']
    #allocation8 [shape = 'u8[8192]{0}', space=vmem, size = 0x2000, scoped, tag = 'output window, operand 0, single buffered']
    %8 = vsyncpa [#allocation3], 0
    %9 = vsyncpa [#allocation6], 0
    %10 = vsyncpa [#allocation4], 0
    // Predicated region
    $region2: #{tpu_custom_call.1} parent=1 // pred_check
      _
    $region3: #{tpu_custom_call.1} parent=1 // pred_check_branch
      %12 = sbr.rel (0) target = $region5
    $region4: #{tpu_custom_call.1} parent=1 // pred_region
      %s14 = ssub.s32 256, 256
      %15 = vsyncadd [#allocation3], %s14
      %s17 = sshll.u32 [#allocation2], 4
      %s18 = int_to_ptr.vmem [resolvable:$true] %s17
      %20 = dma.hbm_to_vmem [thread:$0]  %s0, 256, %s18, [#allocation3]
    $region5: #{tpu_custom_call.1} parent=1 // pred_fallthru
      _
    // Predicated region
    $region6: #{tpu_custom_call.1} parent=1 // pred_check
      _
    $region7: #{tpu_custom_call.1} parent=1 // pred_check_branch
      %22 = sbr.rel (0) target = $region9
    $region8: #{tpu_custom_call.1} parent=1 // pred_region
      %s24 = ssub.s32 128, 128
      %25 = vsyncadd [#allocation6], %s24
      %s27 = sshll.u32 [#allocation5], 4
      %s28 = int_to_ptr.vmem [resolvable:$true] %s27
      %30 = dma.hbm_to_vmem [thread:$0]  %s1, 128, %s28, [#allocation6]
    $region9: #{tpu_custom_call.1} parent=1 // pred_fallthru
      _
    // Predicated region
    $region10: #{tpu_custom_call.1} parent=1 // pred_check
      _
    $region11: #{tpu_custom_call.1} parent=1 // pred_check_branch
      %32 = sbr.rel (0) target = $region13
    $region12: #{tpu_custom_call.1} parent=1 // pred_region
      %s34 = ssub.s32 2048, 2048
      %35 = vsyncadd [#allocation6], %s34
      %s36 = sshll.u32 [#allocation7], 4
      %s37 = int_to_ptr.vmem [resolvable:$true] %s36
      %42 = dma.hbm_to_vmem [thread:$0]  %s2, 2048, %s37, [#allocation6], 256, 256, 16
    $region13: #{tpu_custom_call.1} parent=1 // pred_fallthru
      _
    // Predicated region
    $region14: #{tpu_custom_call.1} parent=1 // pred_check
      _
    $region15: #{tpu_custom_call.1} parent=1 // pred_check_branch
      %44 = sbr.rel (0) target = $region17
    $region16: #{tpu_custom_call.1} parent=1 // pred_region
      %45 = dma.done [#allocation3], 256
    $region17: #{tpu_custom_call.1} parent=1 // pred_fallthru
      _
    // Predicated region
    $region18: #{tpu_custom_call.1} parent=1 // pred_check
      _
    $region19: #{tpu_custom_call.1} parent=1 // pred_check_branch
      %47 = sbr.rel (0) target = $region21
    $region20: #{tpu_custom_call.1} parent=1 // pred_region
      %48 = dma.done [#allocation6], 128
    $region21: #{tpu_custom_call.1} parent=1 // pred_fallthru
      _
    // Predicated region
    $region22: #{tpu_custom_call.1} parent=1 // pred_check
      _
    $region23: #{tpu_custom_call.1} parent=1 // pred_check_branch
      %50 = sbr.rel (0) target = $region25
    $region24: #{tpu_custom_call.1} parent=1 // pred_region
      %51 = dma.done [#allocation6], 2048
    $region25: #{tpu_custom_call.1} parent=1 // pred_fallthru
      _
    %v52 = vld [vmem:[#allocation5] sm:$0xff]
    %v53 = vld [vmem:[#allocation7] sm:$0xff]
    %v54 = vld [vmem:[#allocation7 + $0x8] sm:$0xff]
    %v55 = vld [vmem:[#allocation7 + $0x10] sm:$0xff]
    %v56 = vld [vmem:[#allocation7 + $0x18] sm:$0xff]
    %v57 = vld [vmem:[#allocation7 + $0x20] sm:$0xff]
    %v58 = vld [vmem:[#allocation7 + $0x28] sm:$0xff]
    %v59 = vld [vmem:[#allocation7 + $0x30] sm:$0xff]
    %v60 = vld [vmem:[#allocation7 + $0x38] sm:$0xff]
    %v61 = vld [vmem:[#allocation7 + $0x40] sm:$0xff]
    %v62 = vld [vmem:[#allocation7 + $0x48] sm:$0xff]
    %v63 = vld [vmem:[#allocation7 + $0x50] sm:$0xff]
    %v64 = vld [vmem:[#allocation7 + $0x58] sm:$0xff]
    %v65 = vld [vmem:[#allocation7 + $0x60] sm:$0xff]
    %v66 = vld [vmem:[#allocation7 + $0x68] sm:$0xff]
    %v67 = vld [vmem:[#allocation7 + $0x70] sm:$0xff]
    %v68 = vld [vmem:[#allocation7 + $0x78] sm:$0xff]
    %vm69 = vcmask 523264
    %v71 = vsel %vm69, %v52, 0
    %73 = vmatprep.subr.mxu0 0.0
    %74 = vmatpush1.msra.mxu0 0.0
    %75 = vmatprep.subr.mxu0 0.0
    %76 = vmatpush1.msra.mxu0 0.0
    %77 = vmatprep.subr.mxu0 0.0
    %78 = vmatpush1.msra.mxu0 0.0
    %79 = vmatprep.subr.mxu0 0.0
    %80 = vmatpush1.msra.mxu0 0.0
    %81 = vmatprep.subr.mxu0 0.0
    %82 = vmatpush1.msra.mxu0 0.0
    %83 = vmatprep.subr.mxu0 0.0
    %84 = vmatpush1.msra.mxu0 0.0
    %85 = vmatprep.subr.mxu0 0.0
    %86 = vmatpush1.msra.mxu0 0.0
    %87 = vmatprep.subr.mxu0 0.0
    %88 = vmatpush1.msra.mxu0 0.0
    %v89 = vand.u32 %v68, 4294901760
    %90 = vmatprep.subr.mxu0 %v89
    %v91 = vand.u32 %v67, 4294901760
    %92 = vmatpush1.msra.mxu0 %v91
    %v93 = vand.u32 %v66, 4294901760
    %94 = vmatprep.subr.mxu0 %v93
    %v95 = vand.u32 %v65, 4294901760
    %96 = vmatpush1.msra.mxu0 %v95
    %v97 = vand.u32 %v64, 4294901760
    %98 = vmatprep.subr.mxu0 %v97
    %v99 = vand.u32 %v63, 4294901760
    %100 = vmatpush1.msra.mxu0 %v99
    %v101 = vand.u32 %v62, 4294901760
    %102 = vmatprep.subr.mxu0 %v101
    %v103 = vand.u32 %v61, 4294901760
    %104 = vmatpush1.msra.mxu0 %v103
    %v105 = vand.u32 %v60, 4294901760
    %106 = vmatprep.subr.mxu0 %v105
    %v107 = vand.u32 %v59, 4294901760
    %108 = vmatpush1.msra.mxu0 %v107
    %v109 = vand.u32 %v58, 4294901760
    %110 = vmatprep.subr.mxu0 %v109
    %v111 = vand.u32 %v57, 4294901760
    %112 = vmatpush1.msra.mxu0 %v111
    %v113 = vand.u32 %v56, 4294901760
    %114 = vmatprep.subr.mxu0 %v113
    %v115 = vand.u32 %v55, 4294901760
    %116 = vmatpush1.msra.mxu0 %v115
    %v117 = vand.u32 %v54, 4294901760
    %118 = vmatprep.subr.mxu0 %v117
    %v119 = vand.u32 %v53, 4294901760
    %120 = vmatpush1.msra.mxu0 %v119
    %121 = vmatprep.subr.mxu0 0.0
    %122 = vmatpush2.msra.mxu0 0.0
    %123 = vmatprep.subr.mxu0 0.0
    %124 = vmatpush2.msra.mxu0 0.0
    %125 = vmatprep.subr.mxu0 0.0
    %126 = vmatpush2.msra.mxu0 0.0
    %127 = vmatprep.subr.mxu0 0.0
    %128 = vmatpush2.msra.mxu0 0.0
    %129 = vmatprep.subr.mxu0 0.0
    %130 = vmatpush2.msra.mxu0 0.0
    %131 = vmatprep.subr.mxu0 0.0
    %132 = vmatpush2.msra.mxu0 0.0
    %133 = vmatprep.subr.mxu0 0.0
    %134 = vmatpush2.msra.mxu0 0.0
    %135 = vmatprep.subr.mxu0 0.0
    %136 = vmatpush2.msra.mxu0 0.0
    %137 = vmatprep.subr.mxu0 0.0
    %138 = vmatpush2.msra.mxu0 0.0
    %139 = vmatprep.subr.mxu0 0.0
    %140 = vmatpush2.msra.mxu0 0.0
    %141 = vmatprep.subr.mxu0 0.0
    %142 = vmatpush2.msra.mxu0 0.0
    %143 = vmatprep.subr.mxu0 0.0
    %144 = vmatpush2.msra.mxu0 0.0
    %145 = vmatprep.subr.mxu0 0.0
    %146 = vmatpush2.msra.mxu0 0.0
    %147 = vmatprep.subr.mxu0 0.0
    %148 = vmatpush2.msra.mxu0 0.0
    %149 = vmatprep.subr.mxu0 0.0
    %150 = vmatpush2.msra.mxu0 0.0
    %151 = vmatprep.subr.mxu0 0.0
    %152 = vmatpush2.msra.mxu0 0.0
    %153 = vmatprep.mubr.f32.mxu0 0.0
    %v154 = vand.u32 %v71, 4294901760
    %v155 = vsub.f32 %v71, %v154
    %v156 = vand.u32 %v155, 4294901760
    %v157 = vsub.f32 %v155, %v156
    %v158 = vand.u32 %v157, 4294901760
    %159 = vmatmul.mubr.f32.gmra.mxu0 %v158
    %v160 = vpop.f32.mrf.mxu0
    %v161 = vadd.f32 0.0, %v160
    %v162 = vpop.f32.mrf.mxu0
    %v163 = vadd.f32 0.0, %v162
    %164 = vdwg.mxu0
    %165 = vmatprep.subr.mxu0 0.0
    %166 = vmatpush1.msra.mxu0 0.0
    %167 = vmatprep.subr.mxu0 0.0
    %168 = vmatpush1.msra.mxu0 0.0
    %169 = vmatprep.subr.mxu0 0.0
    %170 = vmatpush1.msra.mxu0 0.0
    %171 = vmatprep.subr.mxu0 0.0
    %172 = vmatpush1.msra.mxu0 0.0
    %173 = vmatprep.subr.mxu0 0.0
    %174 = vmatpush1.msra.mxu0 0.0
    %175 = vmatprep.subr.mxu0 0.0
    %176 = vmatpush1.msra.mxu0 0.0
    %177 = vmatprep.subr.mxu0 0.0
    %178 = vmatpush1.msra.mxu0 0.0
    %179 = vmatprep.subr.mxu0 0.0
    %180 = vmatpush1.msra.mxu0 0.0
    %v181 = vand.u32 %v68, 4294901760
    %v182 = vsub.f32 %v68, %v181
    %v183 = vand.u32 %v182, 4294901760
    %v184 = vsub.f32 %v182, %v183
    %v185 = vand.u32 %v184, 4294901760
    %186 = vmatprep.subr.mxu0 %v185
    %v187 = vand.u32 %v67, 4294901760
    %v188 = vsub.f32 %v67, %v187
    %v189 = vand.u32 %v188, 4294901760
    %v190 = vsub.f32 %v188, %v189
    %v191 = vand.u32 %v190, 4294901760
    %192 = vmatpush1.msra.mxu0 %v191
    %v193 = vand.u32 %v66, 4294901760
    %v194 = vsub.f32 %v66, %v193
    %v195 = vand.u32 %v194, 4294901760
    %v196 = vsub.f32 %v194, %v195
    %v197 = vand.u32 %v196, 4294901760
    %198 = vmatprep.subr.mxu0 %v197
    %v199 = vand.u32 %v65, 4294901760
    %v200 = vsub.f32 %v65, %v199
    %v201 = vand.u32 %v200, 4294901760
    %v202 = vsub.f32 %v200, %v201
    %v203 = vand.u32 %v202, 4294901760
    %204 = vmatpush1.msra.mxu0 %v203
    %v205 = vand.u32 %v64, 4294901760
    %v206 = vsub.f32 %v64, %v205
    %v207 = vand.u32 %v206, 4294901760
    %v208 = vsub.f32 %v206, %v207
    %v209 = vand.u32 %v208, 4294901760
    %210 = vmatprep.subr.mxu0 %v209
    %v211 = vand.u32 %v63, 4294901760
    %v212 = vsub.f32 %v63, %v211
    %v213 = vand.u32 %v212, 4294901760
    %v214 = vsub.f32 %v212, %v213
    %v215 = vand.u32 %v214, 4294901760
    %216 = vmatpush1.msra.mxu0 %v215
    %v217 = vand.u32 %v62, 4294901760
    %v218 = vsub.f32 %v62, %v217
    %v219 = vand.u32 %v218, 4294901760
    %v220 = vsub.f32 %v218, %v219
    %v221 = vand.u32 %v220, 4294901760
    %222 = vmatprep.subr.mxu0 %v221
    %v223 = vand.u32 %v61, 4294901760
    %v224 = vsub.f32 %v61, %v223
    %v225 = vand.u32 %v224, 4294901760
    %v226 = vsub.f32 %v224, %v225
    %v227 = vand.u32 %v226, 4294901760
    %228 = vmatpush1.msra.mxu0 %v227
    %v229 = vand.u32 %v60, 4294901760
    %v230 = vsub.f32 %v60, %v229
    %v231 = vand.u32 %v230, 4294901760
    %v232 = vsub.f32 %v230, %v231
    %v233 = vand.u32 %v232, 4294901760
    %234 = vmatprep.subr.mxu0 %v233
    %v235 = vand.u32 %v59, 4294901760
    %v236 = vsub.f32 %v59, %v235
    %v237 = vand.u32 %v236, 4294901760
    %v238 = vsub.f32 %v236, %v237
    %v239 = vand.u32 %v238, 4294901760
    %240 = vmatpush1.msra.mxu0 %v239
    %v241 = vand.u32 %v58, 4294901760
    %v242 = vsub.f32 %v58, %v241
    %v243 = vand.u32 %v242, 4294901760
    %v244 = vsub.f32 %v242, %v243
    %v245 = vand.u32 %v244, 4294901760
    %246 = vmatprep.subr.mxu0 %v245
    %v247 = vand.u32 %v57, 4294901760
    %v248 = vsub.f32 %v57, %v247
    %v249 = vand.u32 %v248, 4294901760
    %v250 = vsub.f32 %v248, %v249
    %v251 = vand.u32 %v250, 4294901760
    %252 = vmatpush1.msra.mxu0 %v251
    %v253 = vand.u32 %v56, 4294901760
    %v254 = vsub.f32 %v56, %v253
    %v255 = vand.u32 %v254, 4294901760
    %v256 = vsub.f32 %v254, %v255
    %v257 = vand.u32 %v256, 4294901760
    %258 = vmatprep.subr.mxu0 %v257
    %v259 = vand.u32 %v55, 4294901760
    %v260 = vsub.f32 %v55, %v259
    %v261 = vand.u32 %v260, 4294901760
    %v262 = vsub.f32 %v260, %v261
    %v263 = vand.u32 %v262, 4294901760
    %264 = vmatpush1.msra.mxu0 %v263
    %v265 = vand.u32 %v54, 4294901760
    %v266 = vsub.f32 %v54, %v265
    %v267 = vand.u32 %v266, 4294901760
    %v268 = vsub.f32 %v266, %v267
    %v269 = vand.u32 %v268, 4294901760
    %270 = vmatprep.subr.mxu0 %v269
    %v271 = vand.u32 %v53, 4294901760
    %v272 = vsub.f32 %v53, %v271
    %v273 = vand.u32 %v272, 4294901760
    %v274 = vsub.f32 %v272, %v273
    %v275 = vand.u32 %v274, 4294901760
    %276 = vmatpush1.msra.mxu0 %v275
    %277 = vmatprep.subr.mxu0 0.0
    %278 = vmatpush2.msra.mxu0 0.0
    %279 = vmatprep.subr.mxu0 0.0
    %280 = vmatpush2.msra.mxu0 0.0
    %281 = vmatprep.subr.mxu0 0.0
    %282 = vmatpush2.msra.mxu0 0.0
    %283 = vmatprep.subr.mxu0 0.0
    %284 = vmatpush2.msra.mxu0 0.0
    %285 = vmatprep.subr.mxu0 0.0
    %286 = vmatpush2.msra.mxu0 0.0
    %287 = vmatprep.subr.mxu0 0.0
    %288 = vmatpush2.msra.mxu0 0.0
    %289 = vmatprep.subr.mxu0 0.0
    %290 = vmatpush2.msra.mxu0 0.0
    %291 = vmatprep.subr.mxu0 0.0
    %292 = vmatpush2.msra.mxu0 0.0
    %293 = vmatprep.subr.mxu0 0.0
    %294 = vmatpush2.msra.mxu0 0.0
    %295 = vmatprep.subr.mxu0 0.0
    %296 = vmatpush2.msra.mxu0 0.0
    %297 = vmatprep.subr.mxu0 0.0
    %298 = vmatpush2.msra.mxu0 0.0
    %299 = vmatprep.subr.mxu0 0.0
    %300 = vmatpush2.msra.mxu0 0.0
    %301 = vmatprep.subr.mxu0 0.0
    %302 = vmatpush2.msra.mxu0 0.0
    %303 = vmatprep.subr.mxu0 0.0
    %304 = vmatpush2.msra.mxu0 0.0
    %305 = vmatprep.subr.mxu0 0.0
    %306 = vmatpush2.msra.mxu0 0.0
    %307 = vmatprep.subr.mxu0 0.0
    %308 = vmatpush2.msra.mxu0 0.0
    %309 = vmatprep.mubr.f32.mxu0 0.0
    %v310 = vand.u32 %v71, 4294901760
    %311 = vmatmul.mubr.f32.gmra.mxu0 %v310
    %v312 = vpop.f32.mrf.mxu0
    %v313 = vadd.f32 %v161, %v312
    %v314 = vpop.f32.mrf.mxu0
    %v315 = vadd.f32 %v163, %v314
    %316 = vdwg.mxu0
    %317 = vmatprep.subr.mxu0 0.0
    %318 = vmatpush1.msra.mxu0 0.0
    %319 = vmatprep.subr.mxu0 0.0
    %320 = vmatpush1.msra.mxu0 0.0
    %321 = vmatprep.subr.mxu0 0.0
    %322 = vmatpush1.msra.mxu0 0.0
    %323 = vmatprep.subr.mxu0 0.0
    %324 = vmatpush1.msra.mxu0 0.0
    %325 = vmatprep.subr.mxu0 0.0
    %326 = vmatpush1.msra.mxu0 0.0
    %327 = vmatprep.subr.mxu0 0.0
    %328 = vmatpush1.msra.mxu0 0.0
    %329 = vmatprep.subr.mxu0 0.0
    %330 = vmatpush1.msra.mxu0 0.0
    %331 = vmatprep.subr.mxu0 0.0
    %332 = vmatpush1.msra.mxu0 0.0
    %v333 = vand.u32 %v68, 4294901760
    %v334 = vsub.f32 %v68, %v333
    %335 = vmatprep.subr.mxu0 %v334
    %v336 = vand.u32 %v67, 4294901760
    %v337 = vsub.f32 %v67, %v336
    %338 = vmatpush1.msra.mxu0 %v337
    %v339 = vand.u32 %v66, 4294901760
    %v340 = vsub.f32 %v66, %v339
    %341 = vmatprep.subr.mxu0 %v340
    %v342 = vand.u32 %v65, 4294901760
    %v343 = vsub.f32 %v65, %v342
    %344 = vmatpush1.msra.mxu0 %v343
    %v345 = vand.u32 %v64, 4294901760
    %v346 = vsub.f32 %v64, %v345
    %347 = vmatprep.subr.mxu0 %v346
    %v348 = vand.u32 %v63, 4294901760
    %v349 = vsub.f32 %v63, %v348
    %350 = vmatpush1.msra.mxu0 %v349
    %v351 = vand.u32 %v62, 4294901760
    %v352 = vsub.f32 %v62, %v351
    %353 = vmatprep.subr.mxu0 %v352
    %v354 = vand.u32 %v61, 4294901760
    %v355 = vsub.f32 %v61, %v354
    %356 = vmatpush1.msra.mxu0 %v355
    %v357 = vand.u32 %v60, 4294901760
    %v358 = vsub.f32 %v60, %v357
    %359 = vmatprep.subr.mxu0 %v358
    %v360 = vand.u32 %v59, 4294901760
    %v361 = vsub.f32 %v59, %v360
    %362 = vmatpush1.msra.mxu0 %v361
    %v363 = vand.u32 %v58, 4294901760
    %v364 = vsub.f32 %v58, %v363
    %365 = vmatprep.subr.mxu0 %v364
    %v366 = vand.u32 %v57, 4294901760
    %v367 = vsub.f32 %v57, %v366
    %368 = vmatpush1.msra.mxu0 %v367
    %v369 = vand.u32 %v56, 4294901760
    %v370 = vsub.f32 %v56, %v369
    %371 = vmatprep.subr.mxu0 %v370
    %v372 = vand.u32 %v55, 4294901760
    %v373 = vsub.f32 %v55, %v372
    %374 = vmatpush1.msra.mxu0 %v373
    %v375 = vand.u32 %v54, 4294901760
    %v376 = vsub.f32 %v54, %v375
    %377 = vmatprep.subr.mxu0 %v376
    %v378 = vand.u32 %v53, 4294901760
    %v379 = vsub.f32 %v53, %v378
    %380 = vmatpush1.msra.mxu0 %v379
    %381 = vmatprep.subr.mxu0 0.0
    %382 = vmatpush2.msra.mxu0 0.0
    %383 = vmatprep.subr.mxu0 0.0
    %384 = vmatpush2.msra.mxu0 0.0
    %385 = vmatprep.subr.mxu0 0.0
    %386 = vmatpush2.msra.mxu0 0.0
    %387 = vmatprep.subr.mxu0 0.0
    %388 = vmatpush2.msra.mxu0 0.0
    %389 = vmatprep.subr.mxu0 0.0
    %390 = vmatpush2.msra.mxu0 0.0
    %391 = vmatprep.subr.mxu0 0.0
    %392 = vmatpush2.msra.mxu0 0.0
    %393 = vmatprep.subr.mxu0 0.0
    %394 = vmatpush2.msra.mxu0 0.0
    %395 = vmatprep.subr.mxu0 0.0
    %396 = vmatpush2.msra.mxu0 0.0
    %397 = vmatprep.subr.mxu0 0.0
    %398 = vmatpush2.msra.mxu0 0.0
    %399 = vmatprep.subr.mxu0 0.0
    %400 = vmatpush2.msra.mxu0 0.0
    %401 = vmatprep.subr.mxu0 0.0
    %402 = vmatpush2.msra.mxu0 0.0
    %403 = vmatprep.subr.mxu0 0.0
    %404 = vmatpush2.msra.mxu0 0.0
    %405 = vmatprep.subr.mxu0 0.0
    %406 = vmatpush2.msra.mxu0 0.0
    %407 = vmatprep.subr.mxu0 0.0
    %408 = vmatpush2.msra.mxu0 0.0
    %409 = vmatprep.subr.mxu0 0.0
    %410 = vmatpush2.msra.mxu0 0.0
    %411 = vmatprep.subr.mxu0 0.0
    %412 = vmatpush2.msra.mxu0 0.0
    %413 = vmatprep.mubr.f32.mxu0 0.0
    %v414 = vand.u32 %v71, 4294901760
    %v415 = vsub.f32 %v71, %v414
    %416 = vmatmul.mubr.f32.gmra.mxu0 %v415
    %v417 = vpop.f32.mrf.mxu0
    %v418 = vadd.f32 %v313, %v417
    %v419 = vpop.f32.mrf.mxu0
    %v420 = vadd.f32 %v315, %v419
    %421 = vdwg.mxu0
    %422 = vmatprep.subr.mxu0 0.0
    %423 = vmatpush1.msra.mxu0 0.0
    %424 = vmatprep.subr.mxu0 0.0
    %425 = vmatpush1.msra.mxu0 0.0
    %426 = vmatprep.subr.mxu0 0.0
    %427 = vmatpush1.msra.mxu0 0.0
    %428 = vmatprep.subr.mxu0 0.0
    %429 = vmatpush1.msra.mxu0 0.0
    %430 = vmatprep.subr.mxu0 0.0
    %431 = vmatpush1.msra.mxu0 0.0
    %432 = vmatprep.subr.mxu0 0.0
    %433 = vmatpush1.msra.mxu0 0.0
    %434 = vmatprep.subr.mxu0 0.0
    %435 = vmatpush1.msra.mxu0 0.0
    %436 = vmatprep.subr.mxu0 0.0
    %437 = vmatpush1.msra.mxu0 0.0
    %v438 = vand.u32 %v68, 4294901760
    %439 = vmatprep.subr.mxu0 %v438
    %v440 = vand.u32 %v67, 4294901760
    %441 = vmatpush1.msra.mxu0 %v440
    %v442 = vand.u32 %v66, 4294901760
    %443 = vmatprep.subr.mxu0 %v442
    %v444 = vand.u32 %v65, 4294901760
    %445 = vmatpush1.msra.mxu0 %v444
    %v446 = vand.u32 %v64, 4294901760
    %447 = vmatprep.subr.mxu0 %v446
    %v448 = vand.u32 %v63, 4294901760
    %449 = vmatpush1.msra.mxu0 %v448
    %v450 = vand.u32 %v62, 4294901760
    %451 = vmatprep.subr.mxu0 %v450
    %v452 = vand.u32 %v61, 4294901760
    %453 = vmatpush1.msra.mxu0 %v452
    %v454 = vand.u32 %v60, 4294901760
    %455 = vmatprep.subr.mxu0 %v454
    %v456 = vand.u32 %v59, 4294901760
    %457 = vmatpush1.msra.mxu0 %v456
    %v458 = vand.u32 %v58, 4294901760
    %459 = vmatprep.subr.mxu0 %v458
    %v460 = vand.u32 %v57, 4294901760
    %461 = vmatpush1.msra.mxu0 %v460
    %v462 = vand.u32 %v56, 4294901760
    %463 = vmatprep.subr.mxu0 %v462
    %v464 = vand.u32 %v55, 4294901760
    %465 = vmatpush1.msra.mxu0 %v464
    %v466 = vand.u32 %v54, 4294901760
    %467 = vmatprep.subr.mxu0 %v466
    %v468 = vand.u32 %v53, 4294901760
    %469 = vmatpush1.msra.mxu0 %v468
    %470 = vmatprep.subr.mxu0 0.0
    %471 = vmatpush2.msra.mxu0 0.0
    %472 = vmatprep.subr.mxu0 0.0
    %473 = vmatpush2.msra.mxu0 0.0
    %474 = vmatprep.subr.mxu0 0.0
    %475 = vmatpush2.msra.mxu0 0.0
    %476 = vmatprep.subr.mxu0 0.0
    %477 = vmatpush2.msra.mxu0 0.0
    %478 = vmatprep.subr.mxu0 0.0
    %479 = vmatpush2.msra.mxu0 0.0
    %480 = vmatprep.subr.mxu0 0.0
    %481 = vmatpush2.msra.mxu0 0.0
    %482 = vmatprep.subr.mxu0 0.0
    %483 = vmatpush2.msra.mxu0 0.0
    %484 = vmatprep.subr.mxu0 0.0
    %485 = vmatpush2.msra.mxu0 0.0
    %486 = vmatprep.subr.mxu0 0.0
    %487 = vmatpush2.msra.mxu0 0.0
    %488 = vmatprep.subr.mxu0 0.0
    %489 = vmatpush2.msra.mxu0 0.0
    %490 = vmatprep.subr.mxu0 0.0
    %491 = vmatpush2.msra.mxu0 0.0
    %492 = vmatprep.subr.mxu0 0.0
    %493 = vmatpush2.msra.mxu0 0.0
    %494 = vmatprep.subr.mxu0 0.0
    %495 = vmatpush2.msra.mxu0 0.0
    %496 = vmatprep.subr.mxu0 0.0
    %497 = vmatpush2.msra.mxu0 0.0
    %498 = vmatprep.subr.mxu0 0.0
    %499 = vmatpush2.msra.mxu0 0.0
    %500 = vmatprep.subr.mxu0 0.0
    %501 = vmatpush2.msra.mxu0 0.0
    %502 = vmatprep.mubr.f32.mxu0 0.0
    %v503 = vand.u32 %v71, 4294901760
    %v504 = vsub.f32 %v71, %v503
    %v505 = vand.u32 %v504, 4294901760
    %506 = vmatmul.mubr.f32.gmra.mxu0 %v505
    %v507 = vpop.f32.mrf.mxu0
    %v508 = vadd.f32 %v418, %v507
    %v509 = vpop.f32.mrf.mxu0
    %v510 = vadd.f32 %v420, %v509
    %511 = vdwg.mxu0
    %512 = vmatprep.subr.mxu0 0.0
    %513 = vmatpush1.msra.mxu0 0.0
    %514 = vmatprep.subr.mxu0 0.0
    %515 = vmatpush1.msra.mxu0 0.0
    %516 = vmatprep.subr.mxu0 0.0
    %517 = vmatpush1.msra.mxu0 0.0
    %518 = vmatprep.subr.mxu0 0.0
    %519 = vmatpush1.msra.mxu0 0.0
    %520 = vmatprep.subr.mxu0 0.0
    %521 = vmatpush1.msra.mxu0 0.0
    %522 = vmatprep.subr.mxu0 0.0
    %523 = vmatpush1.msra.mxu0 0.0
    %524 = vmatprep.subr.mxu0 0.0
    %525 = vmatpush1.msra.mxu0 0.0
    %526 = vmatprep.subr.mxu0 0.0
    %527 = vmatpush1.msra.mxu0 0.0
    %v528 = vand.u32 %v68, 4294901760
    %v529 = vsub.f32 %v68, %v528
    %v530 = vand.u32 %v529, 4294901760
    %531 = vmatprep.subr.mxu0 %v530
    %v532 = vand.u32 %v67, 4294901760
    %v533 = vsub.f32 %v67, %v532
    %v534 = vand.u32 %v533, 4294901760
    %535 = vmatpush1.msra.mxu0 %v534
    %v536 = vand.u32 %v66, 4294901760
    %v537 = vsub.f32 %v66, %v536
    %v538 = vand.u32 %v537, 4294901760
    %539 = vmatprep.subr.mxu0 %v538
    %v540 = vand.u32 %v65, 4294901760
    %v541 = vsub.f32 %v65, %v540
    %v542 = vand.u32 %v541, 4294901760
    %543 = vmatpush1.msra.mxu0 %v542
    %v544 = vand.u32 %v64, 4294901760
    %v545 = vsub.f32 %v64, %v544
    %v546 = vand.u32 %v545, 4294901760
    %547 = vmatprep.subr.mxu0 %v546
    %v548 = vand.u32 %v63, 4294901760
    %v549 = vsub.f32 %v63, %v548
    %v550 = vand.u32 %v549, 4294901760
    %551 = vmatpush1.msra.mxu0 %v550
    %v552 = vand.u32 %v62, 4294901760
    %v553 = vsub.f32 %v62, %v552
    %v554 = vand.u32 %v553, 4294901760
    %555 = vmatprep.subr.mxu0 %v554
    %v556 = vand.u32 %v61, 4294901760
    %v557 = vsub.f32 %v61, %v556
    %v558 = vand.u32 %v557, 4294901760
    %559 = vmatpush1.msra.mxu0 %v558
    %v560 = vand.u32 %v60, 4294901760
    %v561 = vsub.f32 %v60, %v560
    %v562 = vand.u32 %v561, 4294901760
    %563 = vmatprep.subr.mxu0 %v562
    %v564 = vand.u32 %v59, 4294901760
    %v565 = vsub.f32 %v59, %v564
    %v566 = vand.u32 %v565, 4294901760
    %567 = vmatpush1.msra.mxu0 %v566
    %v568 = vand.u32 %v58, 4294901760
    %v569 = vsub.f32 %v58, %v568
    %v570 = vand.u32 %v569, 4294901760
    %571 = vmatprep.subr.mxu0 %v570
    %v572 = vand.u32 %v57, 4294901760
    %v573 = vsub.f32 %v57, %v572
    %v574 = vand.u32 %v573, 4294901760
    %575 = vmatpush1.msra.mxu0 %v574
    %v576 = vand.u32 %v56, 4294901760
    %v577 = vsub.f32 %v56, %v576
    %v578 = vand.u32 %v577, 4294901760
    %579 = vmatprep.subr.mxu0 %v578
    %v580 = vand.u32 %v55, 4294901760
    %v581 = vsub.f32 %v55, %v580
    %v582 = vand.u32 %v581, 4294901760
    %583 = vmatpush1.msra.mxu0 %v582
    %v584 = vand.u32 %v54, 4294901760
    %v585 = vsub.f32 %v54, %v584
    %v586 = vand.u32 %v585, 4294901760
    %587 = vmatprep.subr.mxu0 %v586
    %v588 = vand.u32 %v53, 4294901760
    %v589 = vsub.f32 %v53, %v588
    %v590 = vand.u32 %v589, 4294901760
    %591 = vmatpush1.msra.mxu0 %v590
    %592 = vmatprep.subr.mxu0 0.0
    %593 = vmatpush2.msra.mxu0 0.0
    %594 = vmatprep.subr.mxu0 0.0
    %595 = vmatpush2.msra.mxu0 0.0
    %596 = vmatprep.subr.mxu0 0.0
    %597 = vmatpush2.msra.mxu0 0.0
    %598 = vmatprep.subr.mxu0 0.0
    %599 = vmatpush2.msra.mxu0 0.0
    %600 = vmatprep.subr.mxu0 0.0
    %601 = vmatpush2.msra.mxu0 0.0
    %602 = vmatprep.subr.mxu0 0.0
    %603 = vmatpush2.msra.mxu0 0.0
    %604 = vmatprep.subr.mxu0 0.0
    %605 = vmatpush2.msra.mxu0 0.0
    %606 = vmatprep.subr.mxu0 0.0
    %607 = vmatpush2.msra.mxu0 0.0
    %608 = vmatprep.subr.mxu0 0.0
    %609 = vmatpush2.msra.mxu0 0.0
    %610 = vmatprep.subr.mxu0 0.0
    %611 = vmatpush2.msra.mxu0 0.0
    %612 = vmatprep.subr.mxu0 0.0
    %613 = vmatpush2.msra.mxu0 0.0
    %614 = vmatprep.subr.mxu0 0.0
    %615 = vmatpush2.msra.mxu0 0.0
    %616 = vmatprep.subr.mxu0 0.0
    %617 = vmatpush2.msra.mxu0 0.0
    %618 = vmatprep.subr.mxu0 0.0
    %619 = vmatpush2.msra.mxu0 0.0
    %620 = vmatprep.subr.mxu0 0.0
    %621 = vmatpush2.msra.mxu0 0.0
    %622 = vmatprep.subr.mxu0 0.0
    %623 = vmatpush2.msra.mxu0 0.0
    %624 = vmatprep.mubr.f32.mxu0 0.0
    %v625 = vand.u32 %v71, 4294901760
    %626 = vmatmul.mubr.f32.gmra.mxu0 %v625
    %v627 = vpop.f32.mrf.mxu0
    %v628 = vadd.f32 %v508, %v627
    %v629 = vpop.f32.mrf.mxu0
    %v630 = vadd.f32 %v510, %v629
    %631 = vdwg.mxu0
    %632 = vmatprep.subr.mxu0 0.0
    %633 = vmatpush1.msra.mxu0 0.0
    %634 = vmatprep.subr.mxu0 0.0
    %635 = vmatpush1.msra.mxu0 0.0
    %636 = vmatprep.subr.mxu0 0.0
    %637 = vmatpush1.msra.mxu0 0.0
    %638 = vmatprep.subr.mxu0 0.0
    %639 = vmatpush1.msra.mxu0 0.0
    %640 = vmatprep.subr.mxu0 0.0
    %641 = vmatpush1.msra.mxu0 0.0
    %642 = vmatprep.subr.mxu0 0.0
    %643 = vmatpush1.msra.mxu0 0.0
    %644 = vmatprep.subr.mxu0 0.0
    %645 = vmatpush1.msra.mxu0 0.0
    %646 = vmatprep.subr.mxu0 0.0
    %647 = vmatpush1.msra.mxu0 0.0
    %v648 = vand.u32 %v68, 4294901760
    %649 = vmatprep.subr.mxu0 %v648
    %v650 = vand.u32 %v67, 4294901760
    %651 = vmatpush1.msra.mxu0 %v650
    %v652 = vand.u32 %v66, 4294901760
    %653 = vmatprep.subr.mxu0 %v652
    %v654 = vand.u32 %v65, 4294901760
    %655 = vmatpush1.msra.mxu0 %v654
    %v656 = vand.u32 %v64, 4294901760
    %657 = vmatprep.subr.mxu0 %v656
    %v658 = vand.u32 %v63, 4294901760
    %659 = vmatpush1.msra.mxu0 %v658
    %v660 = vand.u32 %v62, 4294901760
    %661 = vmatprep.subr.mxu0 %v660
    %v662 = vand.u32 %v61, 4294901760
    %663 = vmatpush1.msra.mxu0 %v662
    %v664 = vand.u32 %v60, 4294901760
    %665 = vmatprep.subr.mxu0 %v664
    %v666 = vand.u32 %v59, 4294901760
    %667 = vmatpush1.msra.mxu0 %v666
    %v668 = vand.u32 %v58, 4294901760
    %669 = vmatprep.subr.mxu0 %v668
    %v670 = vand.u32 %v57, 4294901760
    %671 = vmatpush1.msra.mxu0 %v670
    %v672 = vand.u32 %v56, 4294901760
    %673 = vmatprep.subr.mxu0 %v672
    %v674 = vand.u32 %v55, 4294901760
    %675 = vmatpush1.msra.mxu0 %v674
    %v676 = vand.u32 %v54, 4294901760
    %677 = vmatprep.subr.mxu0 %v676
    %v678 = vand.u32 %v53, 4294901760
    %679 = vmatpush1.msra.mxu0 %v678
    %680 = vmatprep.subr.mxu0 0.0
    %681 = vmatpush2.msra.mxu0 0.0
    %682 = vmatprep.subr.mxu0 0.0
    %683 = vmatpush2.msra.mxu0 0.0
    %684 = vmatprep.subr.mxu0 0.0
    %685 = vmatpush2.msra.mxu0 0.0
    %686 = vmatprep.subr.mxu0 0.0
    %687 = vmatpush2.msra.mxu0 0.0
    %688 = vmatprep.subr.mxu0 0.0
    %689 = vmatpush2.msra.mxu0 0.0
    %690 = vmatprep.subr.mxu0 0.0
    %691 = vmatpush2.msra.mxu0 0.0
    %692 = vmatprep.subr.mxu0 0.0
    %693 = vmatpush2.msra.mxu0 0.0
    %694 = vmatprep.subr.mxu0 0.0
    %695 = vmatpush2.msra.mxu0 0.0
    %696 = vmatprep.subr.mxu0 0.0
    %697 = vmatpush2.msra.mxu0 0.0
    %698 = vmatprep.subr.mxu0 0.0
    %699 = vmatpush2.msra.mxu0 0.0
    %700 = vmatprep.subr.mxu0 0.0
    %701 = vmatpush2.msra.mxu0 0.0
    %702 = vmatprep.subr.mxu0 0.0
    %703 = vmatpush2.msra.mxu0 0.0
    %704 = vmatprep.subr.mxu0 0.0
    %705 = vmatpush2.msra.mxu0 0.0
    %706 = vmatprep.subr.mxu0 0.0
    %707 = vmatpush2.msra.mxu0 0.0
    %708 = vmatprep.subr.mxu0 0.0
    %709 = vmatpush2.msra.mxu0 0.0
    %710 = vmatprep.subr.mxu0 0.0
    %711 = vmatpush2.msra.mxu0 0.0
    %712 = vmatprep.mubr.f32.mxu0 0.0
    %v713 = vand.u32 %v71, 4294901760
    %714 = vmatmul.mubr.f32.gmra.mxu0 %v713
    %v715 = vpop.f32.mrf.mxu0
    %v716 = vadd.f32 %v628, %v715
    %v717 = vpop.f32.mrf.mxu0
    %v718 = vadd.f32 %v630, %v717
    %719 = vdwg.mxu0
    %v720 = vld [vmem:[#allocation2] sm:$0xff]
    %v721 = vld [vmem:[#allocation2 + $0x8] sm:$0xff]
    %v722 = vmul.f32 %v720, %v716
    %v723 = vmul.f32 %v721, %v718
    %724 = vst [vmem:[#allocation8] sm:$0xff] %v722
    %725 = vst [vmem:[#allocation8 + $0x8] sm:$0xff] %v723
    // Predicated region
    $region26: #{tpu_custom_call.1} parent=1 // pred_check
      _
    $region27: #{tpu_custom_call.1} parent=1 // pred_check_branch
      %727 = sbr.rel (0) target = $region29
    $region28: #{tpu_custom_call.1} parent=1 // pred_region
      %s729 = ssub.s32 256, 256
      %730 = vsyncadd [#allocation4], %s729
      %s732 = sshll.u32 [#allocation8], 4
      %s733 = int_to_ptr.vmem [resolvable:$true] %s732
      %735 = dma.vmem_to_hbm [thread:$0]  %s733, 256, %s3, [#allocation4]
    $region29: #{tpu_custom_call.1} parent=1 // pred_fallthru
      _
    // Predicated region
    $region30: #{tpu_custom_call.1} parent=1 // pred_check
      _
    $region31: #{tpu_custom_call.1} parent=1 // pred_check_branch
      %737 = sbr.rel (0) target = $region33
    $region32: #{tpu_custom_call.1} parent=1 // pred_region
      %738 = dma.done [#allocation4], 256
    $region33: #{tpu_custom_call.1} parent=1 // pred_fallthru
      _
    %739 = vsyncpa [#allocation3], 1
    %740 = vsyncpa [#allocation6], 1
    %741 = vsyncpa [#allocation4], 1

// kernel: tpu_custom_call.1
$region0: #{tpu_custom_call.1}
  #allocation0 [shape = 'u32[]', space=smem, size = 0x4, offset = 0x4, fixed_abs, tag = 'smem constant byte address 0x4 - core index']
  #allocation1 [shape = 'u32[144,128]{1,0:T(1,128)}', space=vmem, size = 0x12000, scoped, tag = 'internal scratch']
  %s0 = inlined_call_operand.hbm [shape: f32[8,256], index: 0, kind: input, shape index: {}]
  %s1 = inlined_call_operand.hbm [shape: f32[8,64], index: 1, kind: input, shape index: {}]
  %s2 = inlined_call_operand.hbm [shape: f32[64,256], index: 2, kind: input, shape index: {}]
  %s3 = inlined_call_operand.hbm [shape: f32[8,256], index: 3, kind: output, shape index: {}]
  %s4 = sld [smem:[#allocation0]]
  $region34: #{tpu_custom_call.1} parent=0
    _
  %s6 = ssub.s32 1, %s4
  %s7 = scalar_select 0, %s6, %s4
  $region1: #{tpu_custom_call.1} parent=0
    #allocation2 [shape = 'u8[8192]{0}', space=vmem, size = 0x2000, scoped, tag = 'input window, operand 0, single buffered']
    #allocation3 [shape = 's32[1]{0}', space=sflag, size = 0x4, scoped, tag = 'scoped memory for tpu_custom_call.1']
    #allocation4 [shape = 's32[1]{0}', space=sflag, size = 0x4, scoped, tag = 'scoped memory for tpu_custom_call.1']
    #allocation5 [shape = 'u8[4096]{0}', space=vmem, size = 0x1000, scoped, tag = 'input window, operand 1, single buffered']
    #allocation6 [shape = 's32[1]{0}', space=sflag, size = 0x4, scoped, tag = 'scoped memory for tpu_custom_call.1']
    #allocation7 [shape = 'u8[65536]{0}', space=vmem, size = 0x10000, scoped, tag = 'input window, operand 2, single buffered']
    #allocation8 [shape = 'u8[8192]{0}', space=vmem, size = 0x2000, scoped, tag = 'output window, operand 0, single buffered']
    %8 = vsyncpa [#allocation3], 0
    %9 = vsyncpa [#allocation6], 0
    %10 = vsyncpa [#allocation4], 0
    // Predicated region
    $region2: #{tpu_custom_call.1} parent=1 // pred_check
      _
    $region3: #{tpu_custom_call.1} parent=1 // pred_check_branch
      %12 = sbr.rel (0) target = $region5
    $region4: #{tpu_custom_call.1} parent=1 // pred_region
      %s14 = ssub.s32 256, 256
      %15 = vsyncadd [#allocation3], %s14
      %s17 = sshll.u32 [#allocation2], 4
      %s18 = int_to_ptr.vmem [resolvable:$true] %s17
      %20 = dma.hbm_to_vmem [thread:$0]  %s0, 256, %s18, [#allocation3]
    $region5: #{tpu_custom_call.1} parent=1 // pred_fallthru
      _
    // Predicated region
    $region6: #{tpu_custom_call.1} parent=1 // pred_check
      _
    $region7: #{tpu_custom_call.1} parent=1 // pred_check_branch
      %22 = sbr.rel (0) target = $region9
    $region8: #{tpu_custom_call.1} parent=1 // pred_region
      %s24 = ssub.s32 128, 128
      %25 = vsyncadd [#allocation6], %s24
      %s27 = sshll.u32 [#allocation5], 4
      %s28 = int_to_ptr.vmem [resolvable:$true] %s27
      %30 = dma.hbm_to_vmem [thread:$0]  %s1, 128, %s28, [#allocation6]
    $region9: #{tpu_custom_call.1} parent=1 // pred_fallthru
      _
    // Predicated region
    $region10: #{tpu_custom_call.1} parent=1 // pred_check
      _
    $region11: #{tpu_custom_call.1} parent=1 // pred_check_branch
      %32 = sbr.rel (0) target = $region13
    $region12: #{tpu_custom_call.1} parent=1 // pred_region
      %s34 = ssub.s32 2048, 2048
      %35 = vsyncadd [#allocation6], %s34
      %s36 = sshll.u32 [#allocation7], 4
      %s37 = int_to_ptr.vmem [resolvable:$true] %s36
      %42 = dma.hbm_to_vmem [thread:$0]  %s2, 2048, %s37, [#allocation6], 256, 256, 16
    $region13: #{tpu_custom_call.1} parent=1 // pred_fallthru
      _
    // Predicated region
    $region14: #{tpu_custom_call.1} parent=1 // pred_check
      _
    $region15: #{tpu_custom_call.1} parent=1 // pred_check_branch
      %44 = sbr.rel (0) target = $region17
    $region16: #{tpu_custom_call.1} parent=1 // pred_region
      %45 = dma.done [#allocation3], 256
    $region17: #{tpu_custom_call.1} parent=1 // pred_fallthru
      _
    // Predicated region
    $region18: #{tpu_custom_call.1} parent=1 // pred_check
      _
    $region19: #{tpu_custom_call.1} parent=1 // pred_check_branch
      %47 = sbr.rel (0) target = $region21
    $region20: #{tpu_custom_call.1} parent=1 // pred_region
      %48 = dma.done [#allocation6], 128
    $region21: #{tpu_custom_call.1} parent=1 // pred_fallthru
      _
    // Predicated region
    $region22: #{tpu_custom_call.1} parent=1 // pred_check
      _
    $region23: #{tpu_custom_call.1} parent=1 // pred_check_branch
      %50 = sbr.rel (0) target = $region25
    $region24: #{tpu_custom_call.1} parent=1 // pred_region
      %51 = dma.done [#allocation6], 2048
    $region25: #{tpu_custom_call.1} parent=1 // pred_fallthru
      _
    %v52 = vld [vmem:[#allocation5] sm:$0xff]
    %v53 = vld [vmem:[#allocation7] sm:$0xff]
    %v54 = vld [vmem:[#allocation7 + $0x8] sm:$0xff]
    %v55 = vld [vmem:[#allocation7 + $0x10] sm:$0xff]
    %v56 = vld [vmem:[#allocation7 + $0x18] sm:$0xff]
    %v57 = vld [vmem:[#allocation7 + $0x20] sm:$0xff]
    %v58 = vld [vmem:[#allocation7 + $0x28] sm:$0xff]
    %v59 = vld [vmem:[#allocation7 + $0x30] sm:$0xff]
    %v60 = vld [vmem:[#allocation7 + $0x38] sm:$0xff]
    %v61 = vld [vmem:[#allocation7 + $0x40] sm:$0xff]
    %v62 = vld [vmem:[#allocation7 + $0x48] sm:$0xff]
    %v63 = vld [vmem:[#allocation7 + $0x50] sm:$0xff]
    %v64 = vld [vmem:[#allocation7 + $0x58] sm:$0xff]
    %v65 = vld [vmem:[#allocation7 + $0x60] sm:$0xff]
    %v66 = vld [vmem:[#allocation7 + $0x68] sm:$0xff]
    %v67 = vld [vmem:[#allocation7 + $0x70] sm:$0xff]
    %v68 = vld [vmem:[#allocation7 + $0x78] sm:$0xff]
    %vm69 = vcmask 523264
    %v71 = vsel %vm69, %v52, 0
    %73 = vmatprep.subr.mxu0 0.0
    %74 = vmatpush1.msra.mxu0 0.0
    %75 = vmatprep.subr.mxu0 0.0
    %76 = vmatpush1.msra.mxu0 0.0
    %77 = vmatprep.subr.mxu0 0.0
    %78 = vmatpush1.msra.mxu0 0.0
    %79 = vmatprep.subr.mxu0 0.0
    %80 = vmatpush1.msra.mxu0 0.0
    %81 = vmatprep.subr.mxu0 0.0
    %82 = vmatpush1.msra.mxu0 0.0
    %83 = vmatprep.subr.mxu0 0.0
    %84 = vmatpush1.msra.mxu0 0.0
    %85 = vmatprep.subr.mxu0 0.0
    %86 = vmatpush1.msra.mxu0 0.0
    %87 = vmatprep.subr.mxu0 0.0
    %88 = vmatpush1.msra.mxu0 0.0
    %89 = vmatprep.subr.mxu0 %v68
    %90 = vmatpush1.msra.mxu0 %v67
    %91 = vmatprep.subr.mxu0 %v66
    %92 = vmatpush1.msra.mxu0 %v65
    %93 = vmatprep.subr.mxu0 %v64
    %94 = vmatpush1.msra.mxu0 %v63
    %95 = vmatprep.subr.mxu0 %v62
    %96 = vmatpush1.msra.mxu0 %v61
    %97 = vmatprep.subr.mxu0 %v60
    %98 = vmatpush1.msra.mxu0 %v59
    %99 = vmatprep.subr.mxu0 %v58
    %100 = vmatpush1.msra.mxu0 %v57
    %101 = vmatprep.subr.mxu0 %v56
    %102 = vmatpush1.msra.mxu0 %v55
    %103 = vmatprep.subr.mxu0 %v54
    %104 = vmatpush1.msra.mxu0 %v53
    %105 = vmatprep.subr.mxu0 0.0
    %106 = vmatpush2.msra.mxu0 0.0
    %107 = vmatprep.subr.mxu0 0.0
    %108 = vmatpush2.msra.mxu0 0.0
    %109 = vmatprep.subr.mxu0 0.0
    %110 = vmatpush2.msra.mxu0 0.0
    %111 = vmatprep.subr.mxu0 0.0
    %112 = vmatpush2.msra.mxu0 0.0
    %113 = vmatprep.subr.mxu0 0.0
    %114 = vmatpush2.msra.mxu0 0.0
    %115 = vmatprep.subr.mxu0 0.0
    %116 = vmatpush2.msra.mxu0 0.0
    %117 = vmatprep.subr.mxu0 0.0
    %118 = vmatpush2.msra.mxu0 0.0
    %119 = vmatprep.subr.mxu0 0.0
    %120 = vmatpush2.msra.mxu0 0.0
    %121 = vmatprep.subr.mxu0 0.0
    %122 = vmatpush2.msra.mxu0 0.0
    %123 = vmatprep.subr.mxu0 0.0
    %124 = vmatpush2.msra.mxu0 0.0
    %125 = vmatprep.subr.mxu0 0.0
    %126 = vmatpush2.msra.mxu0 0.0
    %127 = vmatprep.subr.mxu0 0.0
    %128 = vmatpush2.msra.mxu0 0.0
    %129 = vmatprep.subr.mxu0 0.0
    %130 = vmatpush2.msra.mxu0 0.0
    %131 = vmatprep.subr.mxu0 0.0
    %132 = vmatpush2.msra.mxu0 0.0
    %133 = vmatprep.subr.mxu0 0.0
    %134 = vmatpush2.msra.mxu0 0.0
    %135 = vmatprep.subr.mxu0 0.0
    %136 = vmatpush2.msra.mxu0 0.0
    %137 = vmatprep.mubr.f32.mxu0 0.0
    %138 = vmatmul.mubr.f32.gmra.mxu0 %v71
    %v139 = vpop.f32.mrf.mxu0
    %v140 = vadd.f32 0.0, %v139
    %v141 = vpop.f32.mrf.mxu0
    %v142 = vadd.f32 0.0, %v141
    %143 = vdwg.mxu0
    %v144 = vld [vmem:[#allocation2] sm:$0xff]
    %v145 = vld [vmem:[#allocation2 + $0x8] sm:$0xff]
    %v146 = vmul.f32 %v144, %v140
    %v147 = vmul.f32 %v145, %v142
    %148 = vst [vmem:[#allocation8] sm:$0xff] %v146
    %149 = vst [vmem:[#allocation8 + $0x8] sm:$0xff] %v147
    // Predicated region
    $region26: #{tpu_custom_call.1} parent=1 // pred_check
      _
    $region27: #{tpu_custom_call.1} parent=1 // pred_check_branch
      %151 = sbr.rel (0) target = $region29
    $region28: #{tpu_custom_call.1} parent=1 // pred_region
      %s153 = ssub.s32 256, 256
      %154 = vsyncadd [#allocation4], %s153
      %s156 = sshll.u32 [#allocation8], 4
      %s157 = int_to_ptr.vmem [resolvable:$true] %s156
      %159 = dma.vmem_to_hbm [thread:$0]  %s157, 256, %s3, [#allocation4]
    $region29: #{tpu_custom_call.1} parent=1 // pred_fallthru
      _
    // Predicated region
    $region30: #{tpu_custom_call.1} parent=1 // pred_check
      _
    $region31: #{tpu_custom_call.1} parent=1 // pred_check_branch
      %161 = sbr.rel (0) target = $region33
    $region32: #{tpu_custom_call.1} parent=1 // pred_region
      %162 = dma.done [#allocation4], 256
    $region33: #{tpu_custom_call.1} parent=1 // pred_fallthru
      _
    %163 = vsyncpa [#allocation3], 1
    %164 = vsyncpa [#allocation6], 1
    %165 = vsyncpa [#allocation4], 1

</llo_original>
